<compile_context>
chip_gen: v7x
topology: tpu7x:2x2x1
jax: 0.10.0
libtpu: 0.0.40
codegen_flags: <defaults>
</compile_context>

<pallas_src>
import math

import jax
import jax.numpy as jnp
from jax.experimental import pallas as pl
from jax.experimental.pallas import tpu as pltpu


# ----------------------------- Pallas kernel ------------------------------ #

def _make_bayesian_flow_kernel(n_classes: int,
                               min_sqrt_beta: float,
                               max_sqrt_beta: float,
                               epsilon: float):
    K = n_classes
    sqrt_K = math.sqrt(float(K))
    inv_K = 1.0 / float(K)

    def kernel(data_ref, t_ref, noise_ref, out_ref):
        # data_ref : (1, bn) int32  class indices     (positions on lanes)
        # t_ref    : (1, bn) float32 times
        # noise_ref: (K, bn) float32 std-normal noise (classes on sublanes)
        # out_ref  : (K, bn) float32 class probabilities
        x = data_ref[...]
        t = t_ref[...]
        eps_n = noise_ref[...]

        bn = out_ref.shape[1]

        # sqrt_beta = clamp(t, max=1-eps) * max_sqrt_beta
        sqrt_beta = jnp.minimum(t, 1.0 - epsilon) * max_sqrt_beta
        lo_beta = sqrt_beta < min_sqrt_beta                    # (1, bn)
        sqrt_beta = jnp.maximum(sqrt_beta, min_sqrt_beta)
        beta = sqrt_beta * sqrt_beta                           # (1, bn)

        class_ids = jax.lax.broadcasted_iota(jnp.int32, (K, bn), 0)
        is_hot = class_ids == x                                # (K, bn)

        # mean = (K * one_hot - 1) * beta  ==  where(is_hot, (K-1)*beta, -beta)
        mean = jnp.where(is_hot, (float(K) - 1.0) * beta, -beta)
        std = sqrt_K * jnp.sqrt(beta)                          # (1, bn)
        logits = mean + std * eps_n                            # rsample (K, bn)

        # softmax over the class (sublane) axis
        m = jnp.max(logits, axis=0, keepdims=True)             # (1, bn)
        e = jnp.exp(logits - m)
        s = jnp.sum(e, axis=0, keepdims=True)                  # (1, bn)
        probs = e * pl.reciprocal(s)                           # exact 1/x

        # where(lo_beta, uniform, probs)
        out_ref[...] = jnp.where(lo_beta, inv_K, probs)

    return kernel


# -------------------------------- wrapper ---------------------------------- #

def _round_up(x: int, m: int) -> int:
    return (x + m - 1) // m * m


def _pick_block_n(n: int, *, max_block: int = 32768) -> int:
    """Lane-axis block: multiple of 128, big enough to amortize the ~0.35us
    per-grid-step overhead, small enough that the double-buffered working set
    stays a few MiB, and (when the problem allows) giving >=2 grid steps so
    v7x can shard the parallel axis across both TensorCores."""
    n128 = _round_up(n, 128)
    block = min(max_block, n128)
    if n128 // block < 2 and n128 >= 256:
        block = _round_up((n128 + 1) // 2, 128)
    return block


def discrete_bayesian_flow_forward(data, t, noise, *,
                                   n_classes: int,
                                   min_sqrt_beta: float = 1e-10,
                                   max_sqrt_beta: float = 1.0,
                                   epsilon: float = 1e-6,
                                   block_n: int | None = None):
    """Pallas implementation of DiscreteBayesianFlow.forward (discretize=False).

    data:  integer class indices, shape S (e.g. [B, H, W])
    t:     float times, same shape S
    noise: standard-normal noise, shape S + [n_classes]
    returns: probs of shape S + [n_classes]  (binary K==2 case follows the
             module: keeps only class-0 prob reshaped like data)
    """
    orig_shape = data.shape
    K = n_classes
    N = int(data.size)

    if block_n is None:
        block_n = _pick_block_n(N)
    else:
        block_n = _round_up(block_n, 128)
    N_pad = _round_up(N, block_n)

    # Flatten + pad the position axis.  Padded positions get t=0, data=0,
    # noise=0 -> they fall into the lo_beta uniform branch (no NaNs) and are
    # sliced off afterwards.
    data_f = data.reshape(N).astype(jnp.int32)
    t_f = t.reshape(N).astype(jnp.float32)
    noise_f = noise.reshape(N, K).astype(jnp.float32)
    if N_pad != N:
        pad = N_pad - N
        data_f = jnp.pad(data_f, (0, pad))
        t_f = jnp.pad(t_f, (0, pad))
        noise_f = jnp.pad(noise_f, ((0, pad), (0, 0)))

    # Re-layout: positions -> lanes, classes -> sublanes (XLA-side plumbing).
    data_2d = data_f.reshape(1, N_pad)
    t_2d = t_f.reshape(1, N_pad)
    noise_kn = noise_f.T                                       # (K, N_pad)

    kernel = _make_bayesian_flow_kernel(K, min_sqrt_beta, max_sqrt_beta,
                                        epsilon)

    cost = pl.CostEstimate(
        flops=10 * N_pad * K,
        transcendentals=N_pad * (K + 2),
        bytes_accessed=N_pad * 8 + 2 * N_pad * K * 4,
    )

    probs_kn = pl.pallas_call(
        kernel,
        out_shape=jax.ShapeDtypeStruct((K, N_pad), jnp.float32),
        grid_spec=pltpu.PrefetchScalarGridSpec(
            num_scalar_prefetch=0,
            grid=(N_pad // block_n,),
            in_specs=[
                pl.BlockSpec((1, block_n), lambda i: (0, i)),
                pl.BlockSpec((1, block_n), lambda i: (0, i)),
                pl.BlockSpec((K, block_n), lambda i: (0, i)),
            ],
            out_specs=pl.BlockSpec((K, block_n), lambda i: (0, i)),
        ),
        compiler_params=pltpu.CompilerParams(
            dimension_semantics=("parallel",)),
        cost_estimate=cost,
    )(data_2d, t_2d, noise_kn)

    probs = probs_kn[:, :N].T.reshape(*orig_shape, K)
    if K == 2:
        # Binary case, mirroring the PyTorch module literally:
        # probs[..., :1].reshape_as(data)
        probs = probs[..., :1].reshape(orig_shape)
    return probs


# --------------------------- pure-JAX reference ---------------------------- #

def _reference_forward(data, t, noise, *, n_classes, min_sqrt_beta,
                       max_sqrt_beta, epsilon):
    K = n_classes
    sqrt_beta = jnp.minimum(t, 1.0 - epsilon) * max_sqrt_beta
    lo_beta = sqrt_beta < min_sqrt_beta
    sqrt_beta = jnp.maximum(sqrt_beta, min_sqrt_beta)
    beta = (sqrt_beta ** 2)[..., None]
    one_hot = jax.nn.one_hot(data, K, dtype=jnp.float32)
    mean = (K * one_hot - 1.0) * beta
    std = math.sqrt(K) * jnp.sqrt(beta)
    logits = mean + std * noise
    probs = jax.nn.softmax(logits, axis=-1)
    probs = jnp.where(lo_beta[..., None], jnp.ones_like(probs) / K, probs)
    return probs


# ---------------------------------- main ----------------------------------- #

if __name__ == "__main__":
    n_classes = 8
    B, H, W = 2, 16, 16          # N = 512 positions -> block_n=256, grid=(2,)

    key = jax.random.PRNGKey(0)
    k_data, k_t, k_noise = jax.random.split(key, 3)

    data = jax.random.randint(k_data, (B, H, W), 0, n_classes, dtype=jnp.int32)
    t = jax.random.uniform(k_t, (B, H, W), dtype=jnp.float32)
    # make a few entries hit the lo_beta branch
    t = t.at[0, 0, :4].set(0.0)
    noise = jax.random.normal(k_noise, (B, H, W, n_classes), dtype=jnp.float32)

    probs = discrete_bayesian_flow_forward(
        data, t, noise,
        n_classes=n_classes,
        min_sqrt_beta=1e-10,
        max_sqrt_beta=1.0,
        epsilon=1e-6,
    )
    probs = jax.block_until_ready(probs)

    ref = _reference_forward(
        data, t, noise,
        n_classes=n_classes, min_sqrt_beta=1e-10,
        max_sqrt_beta=1.0, epsilon=1e-6)

    assert probs.shape == (B, H, W, n_classes)
    assert jnp.allclose(probs, ref, atol=1e-5, rtol=1e-5)
    # rows sum to 1
    assert jnp.allclose(probs.sum(-1), jnp.ones((B, H, W)), atol=1e-5)

    print("KERNEL_OK")
</pallas_src>

<mosaic_0001>
module attributes {stable_mosaic.version = 11 : i64} {
  func.func @kernel(%arg0: i32, %arg1: memref<1x256xi32, #tpu.memory_space<vmem>>, %arg2: memref<1x256xf32, #tpu.memory_space<vmem>>, %arg3: memref<8x256xf32, #tpu.memory_space<vmem>>, %arg4: memref<8x256xf32, #tpu.memory_space<vmem>>) attributes {dimension_semantics = [#tpu.dimension_semantics<parallel>], iteration_bounds = array<i64: 2>, scalar_prefetch = 0 : i64, scratch_operands = 0 : i64, tpu.core_type = #tpu.core_type<tc>, window_params = [{transform_indices = @transform_0, window_bounds = array<i64: 1, 256>}, {transform_indices = @transform_1, window_bounds = array<i64: 1, 256>}, {transform_indices = @transform_2, window_bounds = array<i64: 8, 256>}, {transform_indices = @transform_3, window_bounds = array<i64: 8, 256>}]} {
    %c0 = arith.constant 0 : index
    %c0_0 = arith.constant 0 : index
    %0 = vector.load %arg1[%c0, %c0_0] : memref<1x256xi32, #tpu.memory_space<vmem>>, vector<1x256xi32>
    %c0_1 = arith.constant 0 : index
    %c0_2 = arith.constant 0 : index
    %1 = vector.load %arg2[%c0_1, %c0_2] : memref<1x256xf32, #tpu.memory_space<vmem>>, vector<1x256xf32>
    %c0_3 = arith.constant 0 : index
    %c0_4 = arith.constant 0 : index
    %2 = vector.load %arg3[%c0_3, %c0_4] : memref<8x256xf32, #tpu.memory_space<vmem>>, vector<8x256xf32>
    %cst = arith.constant 0.999998986 : f32
    %3 = vector.broadcast %cst : f32 to vector<1x256xf32>
    %4 = arith.minimumf %1, %3 : vector<1x256xf32>
    %cst_5 = arith.constant 1.000000e+00 : f32
    %5 = vector.broadcast %cst_5 : f32 to vector<1x256xf32>
    %6 = arith.mulf %4, %5 : vector<1x256xf32>
    %cst_6 = arith.constant 1.000000e-10 : f32
    %7 = vector.broadcast %cst_6 : f32 to vector<1x256xf32>
    %8 = arith.cmpf olt, %6, %7 : vector<1x256xf32>
    %cst_7 = arith.constant 1.000000e-10 : f32
    %9 = vector.broadcast %cst_7 : f32 to vector<1x256xf32>
    %10 = arith.maximumf %6, %9 : vector<1x256xf32>
    %11 = arith.mulf %10, %10 : vector<1x256xf32>
    %12 = tpu.iota {dimensions = array<i32: 0>} : vector<8x256xi32>
    %13 = vector.broadcast %0 : vector<1x256xi32> to vector<8x256xi32>
    %14 = arith.cmpi eq, %12, %13 : vector<8x256xi32>
    %cst_8 = arith.constant 7.000000e+00 : f32
    %15 = vector.broadcast %cst_8 : f32 to vector<1x256xf32>
    %16 = arith.mulf %15, %11 : vector<1x256xf32>
    %cst_9 = arith.constant 0.000000e+00 : f32
    %17 = vector.broadcast %cst_9 : f32 to vector<1x256xf32>
    %18 = arith.subf %17, %11 : vector<1x256xf32>
    %19 = vector.shape_cast %16 : vector<1x256xf32> to vector<1x256xf32>
    %20 = vector.broadcast %19 : vector<1x256xf32> to vector<8x256xf32>
    %21 = vector.shape_cast %18 : vector<1x256xf32> to vector<1x256xf32>
    %22 = vector.broadcast %21 : vector<1x256xf32> to vector<8x256xf32>
    %23 = arith.select %14, %20, %22 : vector<8x256xi1>, vector<8x256xf32>
    %24 = math.sqrt %11 : vector<1x256xf32>
    %cst_10 = arith.constant 2.82842708 : f32
    %25 = vector.broadcast %cst_10 : f32 to vector<1x256xf32>
    %26 = arith.mulf %25, %24 : vector<1x256xf32>
    %27 = vector.broadcast %26 : vector<1x256xf32> to vector<8x256xf32>
    %28 = arith.mulf %27, %2 : vector<8x256xf32>
    %29 = arith.addf %23, %28 : vector<8x256xf32>
    %cst_11 = arith.constant dense<0xFF800000> : vector<256xf32>
    %30 = vector.multi_reduction <maximumf>, %29, %cst_11 [0] : vector<8x256xf32> to vector<256xf32>
    %31 = vector.shape_cast %30 : vector<256xf32> to vector<1x256xf32>
    %32 = vector.broadcast %31 : vector<1x256xf32> to vector<8x256xf32>
    %33 = arith.subf %29, %32 : vector<8x256xf32>
    %34 = math.exp %33 : vector<8x256xf32>
    %cst_12 = arith.constant dense<0.000000e+00> : vector<256xf32>
    %35 = vector.multi_reduction <add>, %34, %cst_12 [0] : vector<8x256xf32> to vector<256xf32>
    %36 = vector.shape_cast %35 : vector<256xf32> to vector<1x256xf32>
    %37 = tpu.reciprocal %36 : vector<1x256xf32> -> vector<1x256xf32>
    %38 = vector.broadcast %37 : vector<1x256xf32> to vector<8x256xf32>
    %39 = arith.mulf %34, %38 : vector<8x256xf32>
    %cst_13 = arith.constant 1.250000e-01 : f32
    %40 = vector.shape_cast %8 : vector<1x256xi1> to vector<1x256xi1>
    %41 = vector.broadcast %40 : vector<1x256xi1> to vector<8x256xi1>
    %42 = vector.broadcast %cst_13 : f32 to vector<8x256xf32>
    %43 = arith.select %41, %42, %39 : vector<8x256xi1>, vector<8x256xf32>
    %c0_14 = arith.constant 0 : index
    %c0_15 = arith.constant 0 : index
    %44 = vector.load %arg4[%c0_14, %c0_15] : memref<8x256xf32, #tpu.memory_space<vmem>>, vector<8x256xf32>
    tpu.vector_store %arg4[%c0_14, %c0_15], %43 {strides = array<i32>} : memref<8x256xf32, #tpu.memory_space<vmem>>, vector<8x256xf32>,
    return
  }
  func.func @transform_0(%arg0: i32) -> (i32, i32) {
    %c0_i32 = arith.constant 0 : i32
    %c0_i32_0 = arith.constant 0 : i32
    return %c0_i32, %arg0 : i32, i32
  }
  func.func @transform_1(%arg0: i32) -> (i32, i32) {
    %c0_i32 = arith.constant 0 : i32
    %c0_i32_0 = arith.constant 0 : i32
    return %c0_i32, %arg0 : i32, i32
  }
  func.func @transform_2(%arg0: i32) -> (i32, i32) {
    %c0_i32 = arith.constant 0 : i32
    %c0_i32_0 = arith.constant 0 : i32
    return %c0_i32, %arg0 : i32, i32
  }
  func.func @transform_3(%arg0: i32) -> (i32, i32) {
    %c0_i32 = arith.constant 0 : i32
    %c0_i32_0 = arith.constant 0 : i32
    return %c0_i32, %arg0 : i32, i32
  }
}

</mosaic_0001>

<llo_original>
// kernel: tpu_custom_call.1
$region0: #{tpu_custom_call.1}
  #allocation0 [shape = 'u32[]', space=smem, size = 0x4, offset = 0x4, fixed_abs, tag = 'smem constant byte address 0x4 - core index']
  #allocation1 [shape = 'u32[144,128]{1,0:T(1,128)}', space=vmem, size = 0x12000, scoped, tag = 'internal scratch']
  %s0 = inlined_call_operand.hbm [shape: s32[1,512], index: 0, kind: input, shape index: {}]
  %s1 = inlined_call_operand.hbm [shape: f32[1,512], index: 1, kind: input, shape index: {}]
  %s2 = inlined_call_operand.hbm [shape: f32[8,512], index: 2, kind: input, shape index: {}]
  %s3 = inlined_call_operand.hbm [shape: f32[8,512], index: 3, kind: output, shape index: {}]
  %s4 = sld [smem:[#allocation0]]
  $region57: #{tpu_custom_call.1} parent=0
    _
  %s6 = ssub.s32 1, %s4
  %s7 = scalar_select 0, %s6, %s4
  $region1: #{tpu_custom_call.1} parent=0
    #allocation2 [shape = 'u8[2048]{0}', space=vmem, size = 0x800, scoped, tag = 'input window, operand 0']
    #allocation3 [shape = 's32[2]{0}', space=sflag, size = 0x8, scoped, tag = 'scoped memory for tpu_custom_call.1']
    #allocation4 [shape = 's32[2]{0}', space=sflag, size = 0x8, scoped, tag = 'scoped memory for tpu_custom_call.1']
    #allocation5 [shape = 'u8[2048]{0}', space=vmem, size = 0x800, scoped, tag = 'input window, operand 1']
    #allocation6 [shape = 's32[2]{0}', space=sflag, size = 0x8, scoped, tag = 'scoped memory for tpu_custom_call.1']
    #allocation7 [shape = 'u8[16384]{0}', space=vmem, size = 0x4000, scoped, tag = 'input window, operand 2']
    #allocation8 [shape = 'u8[16384]{0}', space=vmem, size = 0x4000, scoped, tag = 'output window, operand 0']
    %8 = vsyncpa [#allocation3], 0
    %s9 = scalar_lea.sflag [#allocation3], 1
    %10 = vsyncpa %s9, 0
    %11 = vsyncpa [#allocation6], 0
    %s12 = scalar_lea.sflag [#allocation6], 1
    %13 = vsyncpa %s12, 0
    %14 = vsyncpa [#allocation4], 0
    %s15 = scalar_lea.sflag [#allocation4], 1
    %16 = vsyncpa %s15, 0
    loop: start=0, step=1, limit=4
    $region2: #{tpu_custom_call.1} parent=1 // loop_pre_header
      _
    $region3: #{tpu_custom_call.1} parent=1 // loop_header
      %s18 = sphi 0, %s22
      %p19 = scmp.ge.s32.totalorder %s18, 4
      %s28 = sphi 0, %s30
      %s31 = sphi 0, %s28
      %s32 = sphi 0, %s31
      %s48 = sphi 0, %s32
      %s54 = sphi 0, %s56
      %s57 = sphi 0, %s54
      %s58 = sphi 0, %s57
      %s74 = sphi 0, %s58
      %s80 = sphi 0, %s82
      %s83 = sphi 0, %s80
      %s84 = sphi 0, %s83
      %s100 = sphi 0, %s84
      %s106 = sphi 0, %s108
      %s109 = sphi 0, %s106
      %s110 = sphi 0, %s109
      %s126 = sphi 0, %s110
    $region4: #{tpu_custom_call.1} parent=1 // loop_header_branch
      %21 = sbr.rel (%p19) target = $region8
    $region5: #{tpu_custom_call.1} parent=1 // loop_body
      %s23 = ssub.s32 %s18, 1
      %s24 = ssub.s32 %s18, 2
      %s25 = sadd.s32 %s18, 1
      %s26 = ssub.s32 %s18, %s25
      %p27 = scmp.eq.s32.totalorder %s26, 0
      %s29 = sadd.s32 %s28, 1
      %s30 = scalar_select %p27, %s28, %s29
      %p33 = pneg %p27
      %p34 = scmp.eq.s32.totalorder %s18, 1
      %p35 = por %p33, %p34
      %p36 = scmp.ne.s32.totalorder %s28, %s31
      %p37 = scmp.eq.s32.totalorder %s18, 0
      %p38 = por %p36, %p37
      %p39 = scmp.ne.s32.totalorder %s28, %s31
      %p40 = scmp.eq.s32.totalorder %s23, 1
      %p41 = por %p39, %p40
      %p42 = scmp.ne.s32.totalorder %s31, %s32
      %p43 = scmp.eq.s32.totalorder %s23, 0
      %p44 = por %p42, %p43
      %p45 = scmp.ne.s32.totalorder %s31, %s32
      %p46 = scmp.eq.s32.totalorder %s24, 1
      %p47 = por %p45, %p46
      %p49 = scmp.ne.s32.totalorder %s32, %s48
      %p50 = scmp.eq.s32.totalorder %s24, 0
      %p51 = por %p49, %p50
      %s52 = ssub.s32 %s18, %s25
      %p53 = scmp.eq.s32.totalorder %s52, 0
      %s55 = sadd.s32 %s54, 1
      %s56 = scalar_select %p53, %s54, %s55
      %p59 = pneg %p53
      %p60 = scmp.eq.s32.totalorder %s18, 1
      %p61 = por %p59, %p60
      %p62 = scmp.ne.s32.totalorder %s54, %s57
      %p63 = scmp.eq.s32.totalorder %s18, 0
      %p64 = por %p62, %p63
      %p65 = scmp.ne.s32.totalorder %s54, %s57
      %p66 = scmp.eq.s32.totalorder %s23, 1
      %p67 = por %p65, %p66
      %p68 = scmp.ne.s32.totalorder %s57, %s58
      %p69 = scmp.eq.s32.totalorder %s23, 0
      %p70 = por %p68, %p69
      %p71 = scmp.ne.s32.totalorder %s57, %s58
      %p72 = scmp.eq.s32.totalorder %s24, 1
      %p73 = por %p71, %p72
      %p75 = scmp.ne.s32.totalorder %s58, %s74
      %p76 = scmp.eq.s32.totalorder %s24, 0
      %p77 = por %p75, %p76
      %s78 = ssub.s32 %s18, %s25
      %p79 = scmp.eq.s32.totalorder %s78, 0
      %s81 = sadd.s32 %s80, 1
      %s82 = scalar_select %p79, %s80, %s81
      %p85 = pneg %p79
      %p86 = scmp.eq.s32.totalorder %s18, 1
      %p87 = por %p85, %p86
      %p88 = scmp.ne.s32.totalorder %s80, %s83
      %p89 = scmp.eq.s32.totalorder %s18, 0
      %p90 = por %p88, %p89
      %p91 = scmp.ne.s32.totalorder %s80, %s83
      %p92 = scmp.eq.s32.totalorder %s23, 1
      %p93 = por %p91, %p92
      %p94 = scmp.ne.s32.totalorder %s83, %s84
      %p95 = scmp.eq.s32.totalorder %s23, 0
      %p96 = por %p94, %p95
      %p97 = scmp.ne.s32.totalorder %s83, %s84
      %p98 = scmp.eq.s32.totalorder %s24, 1
      %p99 = por %p97, %p98
      %p101 = scmp.ne.s32.totalorder %s84, %s100
      %p102 = scmp.eq.s32.totalorder %s24, 0
      %p103 = por %p101, %p102
      %s104 = ssub.s32 %s18, %s25
      %p105 = scmp.eq.s32.totalorder %s104, 0
      %s107 = sadd.s32 %s106, 1
      %s108 = scalar_select %p105, %s106, %s107
      %p111 = pneg %p105
      %p112 = scmp.eq.s32.totalorder %s18, 1
      %p113 = por %p111, %p112
      %p114 = scmp.ne.s32.totalorder %s106, %s109
      %p115 = scmp.eq.s32.totalorder %s18, 0
      %p116 = por %p114, %p115
      %p117 = scmp.ne.s32.totalorder %s106, %s109
      %p118 = scmp.eq.s32.totalorder %s23, 1
      %p119 = por %p117, %p118
      %p120 = scmp.ne.s32.totalorder %s109, %s110
      %p121 = scmp.eq.s32.totalorder %s23, 0
      %p122 = por %p120, %p121
      %p123 = scmp.ne.s32.totalorder %s109, %s110
      %p124 = scmp.eq.s32.totalorder %s24, 1
      %p125 = por %p123, %p124
      %p127 = scmp.ne.s32.totalorder %s110, %s126
      %p128 = scmp.eq.s32.totalorder %s24, 0
      %p129 = por %p127, %p128
      %p130 = scmp.le.s32.totalorder 1, %s18
      %p131 = scmp.lt.s32.totalorder %s18, 3
      %p132 = pnand %p130, %p131
      %p133 = pneg %p132
      // Predicated region
      $region9: #{tpu_custom_call.1} parent=5 // pred_check
        _
      $region10: #{tpu_custom_call.1} parent=5 // pred_check_branch
        %135 = sbr.rel (%p132) target = $region12
      $region11: #{tpu_custom_call.1} parent=5 // pred_region
        %s136 = ssub.s32 %s18, 1
      $region12: #{tpu_custom_call.1} parent=5 // pred_fallthru
        _
      %p137 = scmp.lt.s32.totalorder %s18, 2
      // Predicated region
      $region13: #{tpu_custom_call.1} parent=5 // pred_check
        %p138 = pneg %p137
      $region14: #{tpu_custom_call.1} parent=5 // pred_check_branch
        %140 = sbr.rel (%p138) target = $region16
      $region15: #{tpu_custom_call.1} parent=5 // pred_region
        // Predicated region
        $region17: #{tpu_custom_call.1} parent=15 // pred_check
          %p141 = pneg %p38
        $region18: #{tpu_custom_call.1} parent=15 // pred_check_branch
          %143 = sbr.rel (%p141) target = $region20
        $region19: #{tpu_custom_call.1} parent=15 // pred_region
          %s144 = sand.u32 %s28, 1
          %s145 = scalar_lea.sflag [#allocation3], %s144
          %s146 = sand.u32 %s28, 1
          %s147 = smul.addr %s146, 2
          %s148 = scalar_lea.vmem [#allocation2], %s147
          %s149 = smul.u32 2, %s18
          %s151 = ssub.s32 32, 32
          %152 = vsyncadd %s145, %s151
          %s153 = smul.addr %s149, 16
          %s154 = scalar_lea.hbm %s0, %s153
          %s156 = sshll.u32 %s148, 4
          %s157 = int_to_ptr.vmem [resolvable:$true] %s156
          %159 = dma.hbm_to_vmem [thread:$0]  %s154, 32, %s157, %s145
        $region20: #{tpu_custom_call.1} parent=15 // pred_fallthru
          _
        // Predicated region
        $region21: #{tpu_custom_call.1} parent=15 // pred_check
          %p160 = pneg %p64
        $region22: #{tpu_custom_call.1} parent=15 // pred_check_branch
          %162 = sbr.rel (%p160) target = $region24
        $region23: #{tpu_custom_call.1} parent=15 // pred_region
          %s163 = sand.u32 %s18, 1
          %s164 = scalar_lea.sflag [#allocation6], %s163
          %s165 = sand.u32 %s54, 1
          %s166 = smul.addr %s165, 2
          %s167 = scalar_lea.vmem [#allocation5], %s166
          %s168 = smul.u32 2, %s18
          %s170 = ssub.s32 32, 32
          %171 = vsyncadd %s164, %s170
          %s172 = smul.addr %s168, 16
          %s173 = scalar_lea.hbm %s1, %s172
          %s175 = sshll.u32 %s167, 4
          %s176 = int_to_ptr.vmem [resolvable:$true] %s175
          %178 = dma.hbm_to_vmem [thread:$0]  %s173, 32, %s176, %s164
        $region24: #{tpu_custom_call.1} parent=15 // pred_fallthru
          _
        // Predicated region
        $region25: #{tpu_custom_call.1} parent=15 // pred_check
          %p179 = pneg %p90
        $region26: #{tpu_custom_call.1} parent=15 // pred_check_branch
          %181 = sbr.rel (%p179) target = $region28
        $region27: #{tpu_custom_call.1} parent=15 // pred_region
          %s182 = sand.u32 %s18, 1
          %s183 = scalar_lea.sflag [#allocation6], %s182
          %s184 = sand.u32 %s80, 1
          %s185 = smul.addr %s184, 16
          %s186 = scalar_lea.vmem [#allocation7], %s185
          %s187 = smul.u32 2, %s18
          %s189 = ssub.s32 256, 256
          %190 = vsyncadd %s183, %s189
          %s191 = smul.addr %s187, 128
          %s192 = scalar_lea.hbm %s2, %s191
          %s194 = sshll.u32 %s186, 4
          %s195 = int_to_ptr.vmem [resolvable:$true] %s194
          %197 = dma.hbm_to_vmem [thread:$0]  %s192, 256, %s195, %s183
        $region28: #{tpu_custom_call.1} parent=15 // pred_fallthru
          _
      $region16: #{tpu_custom_call.1} parent=5 // pred_fallthru
        _
      %p198 = scmp.le.s32.totalorder 1, %s18
      %p199 = scmp.lt.s32.totalorder %s18, 3
      %p200 = pnand %p198, %p199
      %p201 = pneg %p200
      // Predicated region
      $region29: #{tpu_custom_call.1} parent=5 // pred_check
        _
      $region30: #{tpu_custom_call.1} parent=5 // pred_check_branch
        %203 = sbr.rel (%p200) target = $region32
      $region31: #{tpu_custom_call.1} parent=5 // pred_region
        %s204 = ssub.s32 %s18, 1
        %s205 = sand.u32 %s31, 1
        %s206 = scalar_lea.sflag [#allocation3], %s205
        %s207 = sand.u32 %s31, 1
        %s208 = smul.addr %s207, 2
        %s209 = scalar_lea.vmem [#allocation2], %s208
        // Predicated region
        $region33: #{tpu_custom_call.1} parent=31 // pred_check
          %p210 = pneg %p44
        $region34: #{tpu_custom_call.1} parent=31 // pred_check_branch
          %212 = sbr.rel (%p210) target = $region36
        $region35: #{tpu_custom_call.1} parent=31 // pred_region
          %213 = dma.done %s206, 32
        $region36: #{tpu_custom_call.1} parent=31 // pred_fallthru
          _
        %s214 = sand.u32 %s23, 1
        %s215 = scalar_lea.sflag [#allocation6], %s214
        %s216 = sand.u32 %s57, 1
        %s217 = smul.addr %s216, 2
        %s218 = scalar_lea.vmem [#allocation5], %s217
        // Predicated region
        $region37: #{tpu_custom_call.1} parent=31 // pred_check
          %p219 = pneg %p70
        $region38: #{tpu_custom_call.1} parent=31 // pred_check_branch
          %221 = sbr.rel (%p219) target = $region40
        $region39: #{tpu_custom_call.1} parent=31 // pred_region
          %222 = dma.done %s215, 32
        $region40: #{tpu_custom_call.1} parent=31 // pred_fallthru
          _
        %s223 = sand.u32 %s23, 1
        %s224 = scalar_lea.sflag [#allocation6], %s223
        %s225 = sand.u32 %s83, 1
        %s226 = smul.addr %s225, 16
        %s227 = scalar_lea.vmem [#allocation7], %s226
        // Predicated region
        $region41: #{tpu_custom_call.1} parent=31 // pred_check
          %p228 = pneg %p96
        $region42: #{tpu_custom_call.1} parent=31 // pred_check_branch
          %230 = sbr.rel (%p228) target = $region44
        $region43: #{tpu_custom_call.1} parent=31 // pred_region
          %231 = dma.done %s224, 256
        $region44: #{tpu_custom_call.1} parent=31 // pred_fallthru
          _
        %s232 = sand.u32 %s31, 1
        %s233 = scalar_lea.sflag [#allocation3], %s232
        %s234 = sand.u32 %s31, 1
        %s235 = smul.addr %s234, 2
        %s236 = scalar_lea.vmem [#allocation2], %s235
        %p237 = pneg %p44
        %p238 = pneg %p41
        %s239 = sand.u32 %s23, 1
        %s240 = scalar_lea.sflag [#allocation6], %s239
        %s241 = sand.u32 %s57, 1
        %s242 = smul.addr %s241, 2
        %s243 = scalar_lea.vmem [#allocation5], %s242
        %p244 = pneg %p70
        %p245 = pneg %p67
        %s246 = sand.u32 %s23, 1
        %s247 = scalar_lea.sflag [#allocation6], %s246
        %s248 = sand.u32 %s83, 1
        %s249 = smul.addr %s248, 16
        %s250 = scalar_lea.vmem [#allocation7], %s249
        %p251 = pneg %p96
        %p252 = pneg %p93
        %p253 = pneg %p122
        %p254 = pneg %p119
        %s255 = sand.u32 %s109, 1
        %s256 = scalar_lea.sflag [#allocation4], %s255
        %s257 = sand.u32 %s109, 1
        %s258 = smul.addr %s257, 16
        %s259 = scalar_lea.vmem [#allocation8], %s258
        %s260 = smul.u32 2, %s23
        %s261 = smul.u32 2, %s23
        %s262 = smul.u32 2, %s23
        %s263 = smul.u32 2, %s23
        %v264 = vld [vmem:[%s209] sm:$0x3]
        %v265 = vld [vmem:[%s218] sm:$0x3]
        %v266 = vld [vmem:[%s227] sm:$0xff]
        %v267 = vld [vmem:[%s227 + $0x8] sm:$0xff]
        %v268 = vmin.f32 %v265, 0.999999
        %vm269 = vcmp.lt.f32.partialorder %v268, 1e-10
        %v270 = vmax.f32 %v268, 1e-10
        %v271 = vmul.f32 %v270, %v270
        %v272 = vlaneseq
        %v273 = vshrl.u32 %v272, 7
        %v274 = vlaneseq
        %v275 = vshrl.u32 %v274, 7
        %v276 = vsub.s32 0, %v275
        %v277 = vrot.slane %v264, %v276
        %v278 = vlaneseq
        %v279 = vshrl.u32 %v278, 7
        %v280 = vsub.s32 1, %v279
        %v281 = vrot.slane %v264, %v280
        %vm282 = vcmp.eq.s32.totalorder %v273, %v277
        %vm283 = vcmp.eq.s32.totalorder %v273, %v281
        %v284 = vmul.f32 %v271, 7.0
        %v285 = vsub.f32 0.0, %v271
        %v287 = vlaneseq
        %v288 = vshrl.u32 %v287, 7
        %v289 = vsub.s32 0, %v288
        %v290 = vrot.slane %v284, %v289
        %v291 = vlaneseq
        %v292 = vshrl.u32 %v291, 7
        %v293 = vsub.s32 1, %v292
        %v294 = vrot.slane %v284, %v293
        %v298 = vlaneseq
        %v299 = vshrl.u32 %v298, 7
        %v300 = vsub.s32 0, %v299
        %v301 = vrot.slane %v285, %v300
        %v302 = vlaneseq
        %v303 = vshrl.u32 %v302, 7
        %v304 = vsub.s32 1, %v303
        %v305 = vrot.slane %v285, %v304
        %v308 = vsel %vm282, %v290, %v301
        %v309 = vsel %vm283, %v294, %v305
        %v310 = vrsqrt.pop %v271
        %v311 = vmul.f32 %v271, %v310
        %vm312 = vcmp.eq.f32.partialorder %v271, inf
        %v313 = vsel %vm312, %v271, %v311
        %vm314 = vcmp.eq.f32.partialorder %v271, 0.0
        %v315 = vand.u32 %v271, 2147483648
        %v316 = vsel %vm314, %v315, %v313
        %v317 = vmul.f32 %v316, 2.828427
        %v319 = vlaneseq
        %v320 = vshrl.u32 %v319, 7
        %v321 = vsub.s32 0, %v320
        %v322 = vrot.slane %v317, %v321
        %v323 = vlaneseq
        %v324 = vshrl.u32 %v323, 7
        %v325 = vsub.s32 1, %v324
        %v326 = vrot.slane %v317, %v325
        %v329 = vmul.f32 %v322, %v266
        %v330 = vmul.f32 %v326, %v267
        %v331 = vadd.f32 %v308, %v329
        %v332 = vadd.f32 %v309, %v330
        %v333 = vrot.slane %v331, 4
        %v334 = vmax.f32 %v331, %v333
        %v335 = vrot.slane %v334, 2
        %v336 = vmax.f32 %v334, %v335
        %v337 = vrot.slane %v336, 1
        %v338 = vmax.f32 %v336, %v337
        %v339 = vrot.slane %v332, 4
        %v340 = vmax.f32 %v332, %v339
        %v341 = vrot.slane %v340, 2
        %v342 = vmax.f32 %v340, %v341
        %v343 = vrot.slane %v342, 1
        %v344 = vmax.f32 %v342, %v343
        %v345 = vsub.f32 %v331, %v338
        %v346 = vsub.f32 %v332, %v344
        %v347 = vmul.f32 %v345, 1.442695
        %v348 = vpow.pop %v347
        %v349 = vmul.f32 %v346, 1.442695
        %v350 = vpow.pop %v349
        %v351 = vrot.slane %v348, 4
        %v352 = vadd.f32 %v348, %v351
        %v353 = vrot.slane %v352, 2
        %v354 = vadd.f32 %v352, %v353
        %v355 = vrot.slane %v354, 1
        %v356 = vadd.f32 %v354, %v355
        %v357 = vrot.slane %v350, 4
        %v358 = vadd.f32 %v350, %v357
        %v359 = vrot.slane %v358, 2
        %v360 = vadd.f32 %v358, %v359
        %v361 = vrot.slane %v360, 1
        %v362 = vadd.f32 %v360, %v361
        %v363 = vrcp.pop %v356
        %v364 = vrcp.pop %v362
        %v365 = vmul.f32 %v348, %v363
        %v366 = vmul.f32 %v350, %v364
        %v367 = vsel %vm269, 1, 0
        %v368 = vlaneseq
        %v369 = vshrl.u32 %v368, 7
        %v370 = vsub.s32 0, %v369
        %v371 = vrot.slane %v367, %v370
        %v372 = vlaneseq
        %v373 = vshrl.u32 %v372, 7
        %v374 = vsub.s32 1, %v373
        %v375 = vrot.slane %v367, %v374
        %vm376 = vcmp.eq.s32.totalorder %v371, 1
        %vm377 = vcmp.eq.s32.totalorder %v375, 1
        %v378 = vsel %vm376, 0.125, %v365
        %v379 = vsel %vm377, 0.125, %v366
        %380 = vst [vmem:[%s259] sm:$0xff] %v378
        %381 = vst [vmem:[%s259 + $0x8] sm:$0xff] %v379
        %s382 = sand.u32 %s109, 1
        %s383 = scalar_lea.sflag [#allocation4], %s382
        %s384 = sand.u32 %s109, 1
        %s385 = smul.addr %s384, 16
        %s386 = scalar_lea.vmem [#allocation8], %s385
        // Predicated region
        $region45: #{tpu_custom_call.1} parent=31 // pred_check
          %p387 = pneg %p119
        $region46: #{tpu_custom_call.1} parent=31 // pred_check_branch
          %389 = sbr.rel (%p387) target = $region48
        $region47: #{tpu_custom_call.1} parent=31 // pred_region
          %s390 = smul.u32 2, %s23
          %s392 = ssub.s32 256, 256
          %393 = vsyncadd %s383, %s392
          %s394 = smul.addr %s390, 128
          %s395 = scalar_lea.hbm %s3, %s394
          %s397 = sshll.u32 %s386, 4
          %s398 = int_to_ptr.vmem [resolvable:$true] %s397
          %400 = dma.vmem_to_hbm [thread:$0]  %s398, 256, %s395, %s383
        $region48: #{tpu_custom_call.1} parent=31 // pred_fallthru
          _
      $region32: #{tpu_custom_call.1} parent=5 // pred_fallthru
        _
      %p401 = scmp.le.s32.totalorder 2, %s18
      // Predicated region
      $region49: #{tpu_custom_call.1} parent=5 // pred_check
        %p402 = pneg %p401
      $region50: #{tpu_custom_call.1} parent=5 // pred_check_branch
        %404 = sbr.rel (%p402) target = $region52
      $region51: #{tpu_custom_call.1} parent=5 // pred_region
        %s405 = ssub.s32 %s18, 2
        // Predicated region
        $region53: #{tpu_custom_call.1} parent=51 // pred_check
          %p406 = pneg %p125
        $region54: #{tpu_custom_call.1} parent=51 // pred_check_branch
          %408 = sbr.rel (%p406) target = $region56
        $region55: #{tpu_custom_call.1} parent=51 // pred_region
          %s409 = sand.u32 %s110, 1
          %s410 = scalar_lea.sflag [#allocation4], %s409
          %s411 = sand.u32 %s110, 1
          %s412 = smul.addr %s411, 16
          %s413 = scalar_lea.vmem [#allocation8], %s412
          %414 = dma.done %s410, 256
        $region56: #{tpu_custom_call.1} parent=51 // pred_fallthru
          _
      $region52: #{tpu_custom_call.1} parent=5 // pred_fallthru
        _
    $region6: #{tpu_custom_call.1} parent=1 // loop_footer
      %s22 = sadd.s32 1, %s18
    $region7: #{tpu_custom_call.1} parent=1 // loop_footer_branch
      %17 = sbr.rel target = $region3
    $region8: #{tpu_custom_call.1} parent=1 // loop_exit
      _
    %415 = vsyncpa [#allocation3], 1
    %s416 = scalar_lea.sflag [#allocation3], 1
    %417 = vsyncpa %s416, 1
    %418 = vsyncpa [#allocation6], 1
    %s419 = scalar_lea.sflag [#allocation6], 1
    %420 = vsyncpa %s419, 1
    %421 = vsyncpa [#allocation4], 1
    %s422 = scalar_lea.sflag [#allocation4], 1
    %423 = vsyncpa %s422, 1

</llo_original>
